<compile_context>
chip_gen: v5e
topology: v5e:2x2
jax: 0.10.0
libtpu: 0.0.40
codegen_flags: <defaults>
</compile_context>

<pallas_src>
import functools

import jax
import jax.numpy as jnp
from jax import lax
from jax.experimental import pallas as pl
from jax.experimental.pallas import tpu as pltpu


# ----------------------------------------------------------------------------
# Kernel
# ----------------------------------------------------------------------------
def _dts_kernel(x_ref, o_ref, *, bs, tW):
    # x_ref: (nB, C, tH, W)
    # o_ref: (nB, Cp, tH, bs*W*bs)   column index = b1*(W*bs) + w*bs + b2
    nB, C, tH, W = x_ref.shape
    Cp = C // (bs * bs)
    Wb = W * bs
    nW = W // tW
    tWb = tW * bs

    # Chunk-invariant one-hot lane scatter, hoisted before all loops:
    #   sw[b2][w, w*bs + b2] = 1.   A few VPU iota/compare ops, hidden by DMA.
    compute_dtype = (x_ref.dtype if jnp.issubdtype(x_ref.dtype, jnp.floating)
                     else jnp.float32)
    w_idx = lax.broadcasted_iota(jnp.int32, (tW, tWb), 0)
    j_idx = lax.broadcasted_iota(jnp.int32, (tW, tWb), 1)
    sws = [(j_idx == w_idx * bs + b2).astype(compute_dtype) for b2 in range(bs)]

    for bi in range(nB):
        for b1 in range(bs):
            for wt in range(nW):
                # Lane-interleave the bs W-phases of this row phase for this
                # W-chunk.  Each phase hits disjoint output lanes, so the f32
                # accumulation is exact (0/1 weights).
                # (v7x note: these bs partials could be fused into one K=bs*tW
                # dot / MRB accumulate; only relevant if MXU-bound.)
                z = None
                for b2 in range(bs):
                    g = b1 * bs + b2
                    x_sub = x_ref[bi, pl.ds(g * Cp, Cp), :, pl.ds(wt * tW, tW)]
                    x_sub = x_sub.reshape(Cp * tH, tW)
                    if x_sub.dtype != compute_dtype:
                        x_sub = x_sub.astype(compute_dtype)
                    p = jnp.dot(x_sub, sws[b2],
                                preferred_element_type=jnp.float32)
                    z = p if z is None else z + p
                z = z.reshape(Cp, tH, tWb).astype(o_ref.dtype)
                # One lane-dense, contiguous store per (b1, chunk); no strided
                # or sublane-masked stores anywhere.
                o_ref[bi, :, :, pl.ds(b1 * Wb + wt * tWb, tWb)] = z


# ----------------------------------------------------------------------------
# Tiling heuristics (generation-aware VMEM budget)
# ----------------------------------------------------------------------------
def _vmem_capacity_bytes():
    try:
        return int(pltpu.get_tpu_info().vmem_capacity_bytes)
    except Exception:
        return 64 * 1024 * 1024  # v7x-safe assumption (v5e/v6e have 128 MiB)


def _sublane_multiple(itemsize):
    # f32 -> 8, bf16/f16 -> 16, int8/fp8 -> 32 rows per sublane tile.
    return {4: 8, 2: 16, 1: 32}.get(itemsize, 8)


def _pick_tiles(N, C, H, W, itemsize):
    cap = _vmem_capacity_bytes()
    vmem_limit = min(cap * 3 // 4, 100 * 1024 * 1024)
    # One grid step holds 2x input block + 2x output block (double buffered,
    # equal sized) plus small f32 chunk intermediates and the one-hot scatter.
    target = max(vmem_limit // 6, 64 * 1024)

    sub = _sublane_multiple(itemsize)
    row_bytes = C * W * itemsize          # one H-row of the input block

    # H tile: prefer whole-H; else the largest sublane-aligned divisor that
    # fits the soft target; else the smallest aligned divisor (still correct).
    if H * row_bytes <= target:
        tH = H
    else:
        tH = 0
        d = (min(H, max(target // row_bytes, 1)) // sub) * sub
        while d >= sub:
            if H % d == 0:
                tH = d
                break
            d -= sub
        if tH == 0:
            aligned = [d for d in range(sub, H, sub) if H % d == 0]
            tH = aligned[0] if aligned else H
            # TODO(synk): a masked last H tile would avoid oversized blocks for
            # prime/awkward H; not needed for typical conv feature maps.

    # Batch folding for small images: amortizes per-step grid overhead and
    # turns many tiny strided DMA chunks into one larger transfer.
    block_bytes = tH * row_bytes
    nB = 1
    d = N
    while d >= 1:
        if N % d == 0 and d * block_bytes <= target:
            nB = d
            break
        d -= 1
    # Keep >= 2 grid steps when possible so v7x megacore has work to split.
    if (N // nB) * (H // tH) < 2 and N >= 2:
        d = N // 2
        while d >= 1:
            if N % d == 0 and d * block_bytes <= target:
                nB = d
                break
            d -= 1
    return tH, nB, int(vmem_limit)


def _pick_w_tile(W, bs):
    # Cap the per-dot MXU tile: K = tW, N = tW*bs.
    cap = max(1, 512 // bs)
    if W <= cap:
        return W
    # Prefer 128-multiples that divide W (dense loads, 128-aligned offsets).
    t = (cap // 128) * 128
    while t >= 128:
        if W % t == 0:
            return t
        t -= 128
    for d in range(cap, 0, -1):
        if W % d == 0:
            return d
    return W


# ----------------------------------------------------------------------------
# Public entry point
# ----------------------------------------------------------------------------
def _depth_to_space_impl(x, bs):
    N, C, H, W = x.shape
    assert C % (bs * bs) == 0, "C must be divisible by block_size**2"
    Cp = C // (bs * bs)
    Hb, Wb = H * bs, W * bs
    itemsize = jnp.dtype(x.dtype).itemsize

    tH, nB, vmem_limit = _pick_tiles(N, C, H, W, itemsize)
    tW = _pick_w_tile(W, bs)

    kernel = functools.partial(_dts_kernel, bs=bs, tW=tW)
    out = pl.pallas_call(
        kernel,
        out_shape=jax.ShapeDtypeStruct((N, Cp, H, bs * Wb), x.dtype),
        grid_spec=pltpu.PrefetchScalarGridSpec(
            num_scalar_prefetch=0,
            grid=(N // nB, H // tH),
            in_specs=[pl.BlockSpec((nB, C, tH, W), lambda n, h: (n, 0, h, 0))],
            out_specs=pl.BlockSpec((nB, Cp, tH, bs * Wb),
                                   lambda n, h: (n, 0, h, 0)),
        ),
        compiler_params=pltpu.CompilerParams(
            dimension_semantics=("parallel", "parallel"),
            vmem_limit_bytes=vmem_limit,
        ),
    )(x)
    # Free contiguous reshape: (N, Cp, H, bs*Wb) -> (N, Cp, H*bs, Wb).
    return out.reshape(N, Cp, Hb, Wb)


depth_to_space = jax.jit(_depth_to_space_impl, static_argnums=1)


def depth_to_space_ref(x, bs):
    # Pure-JAX reference mirroring the PyTorch module exactly.
    N, C, H, W = x.shape
    Cp = C // (bs * bs)
    y = x.reshape(N, bs, bs, Cp, H, W)
    y = jnp.transpose(y, (0, 3, 4, 1, 5, 2))
    return y.reshape(N, Cp, H * bs, W * bs)


if __name__ == "__main__":
    block_size = 2
    key = jax.random.PRNGKey(0)
    x = jax.random.normal(key, (2, 8, 16, 16), dtype=jnp.float32)

    out = jax.block_until_ready(depth_to_space(x, block_size))
    ref = depth_to_space_ref(x, block_size)

    assert out.shape == ref.shape == (2, 2, 32, 32)
    assert jnp.allclose(out, ref, atol=1e-6, rtol=1e-6)
    print("KERNEL_OK")
</pallas_src>

<mosaic_0001>
module attributes {stable_mosaic.version = 11 : i64} {
  func.func @_dts_kernel(%arg0: i32, %arg1: i32, %arg2: memref<1x8x16x16xf32, #tpu.memory_space<vmem>>, %arg3: memref<1x2x16x64xf32, #tpu.memory_space<vmem>>) attributes {dimension_semantics = [#tpu.dimension_semantics<parallel>, #tpu.dimension_semantics<parallel>], iteration_bounds = array<i64: 2, 1>, scalar_prefetch = 0 : i64, scratch_operands = 0 : i64, tpu.core_type = #tpu.core_type<tc>, window_params = [{transform_indices = @transform_0, window_bounds = array<i64: 1, 8, 16, 16>}, {transform_indices = @transform_1, window_bounds = array<i64: 1, 2, 16, 64>}]} {
    %0 = tpu.iota {dimensions = array<i32: 0>} : vector<16x32xi32>
    %1 = tpu.iota {dimensions = array<i32: 1>} : vector<16x32xi32>
    %c2_i32 = arith.constant 2 : i32
    %2 = vector.broadcast %c2_i32 : i32 to vector<16x32xi32>
    %3 = arith.muli %0, %2 : vector<16x32xi32>
    %c0_i32 = arith.constant 0 : i32
    %4 = vector.broadcast %c0_i32 : i32 to vector<16x32xi32>
    %5 = arith.addi %3, %4 : vector<16x32xi32>
    %6 = arith.cmpi eq, %1, %5 : vector<16x32xi32>
    %7 = arith.extui %6 : vector<16x32xi1> to vector<16x32xi32>
    %8 = arith.sitofp %7 : vector<16x32xi32> to vector<16x32xf32>
    %c2_i32_0 = arith.constant 2 : i32
    %9 = vector.broadcast %c2_i32_0 : i32 to vector<16x32xi32>
    %10 = arith.muli %0, %9 : vector<16x32xi32>
    %c1_i32 = arith.constant 1 : i32
    %11 = vector.broadcast %c1_i32 : i32 to vector<16x32xi32>
    %12 = arith.addi %10, %11 : vector<16x32xi32>
    %13 = arith.cmpi eq, %1, %12 : vector<16x32xi32>
    %14 = arith.extui %13 : vector<16x32xi1> to vector<16x32xi32>
    %15 = arith.sitofp %14 : vector<16x32xi32> to vector<16x32xf32>
    %c0 = arith.constant 0 : index
    %c0_1 = arith.constant 0 : index
    %c0_2 = arith.constant 0 : index
    %c0_3 = arith.constant 0 : index
    %16 = vector.load %arg2[%c0, %c0_1, %c0_2, %c0_3] : memref<1x8x16x16xf32, #tpu.memory_space<vmem>>, vector<1x2x16x16xf32>
    %17 = vector.shape_cast %16 : vector<1x2x16x16xf32> to vector<2x16x16xf32>
    %18 = vector.shape_cast %17 : vector<2x16x16xf32> to vector<32x16xf32>
    %cst = arith.constant dense<0.000000e+00> : vector<32x32xf32>
    %19 = tpu.matmul %18, %8, %cst {dimension_numbers = #tpu.dot_dimension_numbers<[1], [0], [0], [1], [0, 0, 1, 1], [], []>} : vector<32x16xf32>, vector<16x32xf32>, vector<32x32xf32> -> vector<32x32xf32>
    %c0_4 = arith.constant 0 : index
    %c2 = arith.constant 2 : index
    %c0_5 = arith.constant 0 : index
    %c0_6 = arith.constant 0 : index
    %20 = vector.load %arg2[%c0_4, %c2, %c0_5, %c0_6] : memref<1x8x16x16xf32, #tpu.memory_space<vmem>>, vector<1x2x16x16xf32>
    %21 = vector.shape_cast %20 : vector<1x2x16x16xf32> to vector<2x16x16xf32>
    %22 = vector.shape_cast %21 : vector<2x16x16xf32> to vector<32x16xf32>
    %cst_7 = arith.constant dense<0.000000e+00> : vector<32x32xf32>
    %23 = tpu.matmul %22, %15, %cst_7 {dimension_numbers = #tpu.dot_dimension_numbers<[1], [0], [0], [1], [0, 0, 1, 1], [], []>} : vector<32x16xf32>, vector<16x32xf32>, vector<32x32xf32> -> vector<32x32xf32>
    %24 = arith.addf %19, %23 : vector<32x32xf32>
    %25 = vector.shape_cast %24 : vector<32x32xf32> to vector<2x16x32xf32>
    %c0_8 = arith.constant 0 : index
    %c0_9 = arith.constant 0 : index
    %c0_10 = arith.constant 0 : index
    %c0_11 = arith.constant 0 : index
    %26 = vector.load %arg3[%c0_8, %c0_9, %c0_10, %c0_11] : memref<1x2x16x64xf32, #tpu.memory_space<vmem>>, vector<1x2x16x32xf32>
    %27 = vector.shape_cast %26 : vector<1x2x16x32xf32> to vector<2x16x32xf32>
    %28 = vector.shape_cast %25 : vector<2x16x32xf32> to vector<1x2x16x32xf32>
    tpu.vector_store %arg3[%c0_8, %c0_9, %c0_10, %c0_11], %28 {strides = array<i32>} : memref<1x2x16x64xf32, #tpu.memory_space<vmem>>, vector<1x2x16x32xf32>,
    %c0_12 = arith.constant 0 : index
    %c4 = arith.constant 4 : index
    %c0_13 = arith.constant 0 : index
    %c0_14 = arith.constant 0 : index
    %29 = vector.load %arg2[%c0_12, %c4, %c0_13, %c0_14] : memref<1x8x16x16xf32, #tpu.memory_space<vmem>>, vector<1x2x16x16xf32>
    %30 = vector.shape_cast %29 : vector<1x2x16x16xf32> to vector<2x16x16xf32>
    %31 = vector.shape_cast %30 : vector<2x16x16xf32> to vector<32x16xf32>
    %cst_15 = arith.constant dense<0.000000e+00> : vector<32x32xf32>
    %32 = tpu.matmul %31, %8, %cst_15 {dimension_numbers = #tpu.dot_dimension_numbers<[1], [0], [0], [1], [0, 0, 1, 1], [], []>} : vector<32x16xf32>, vector<16x32xf32>, vector<32x32xf32> -> vector<32x32xf32>
    %c0_16 = arith.constant 0 : index
    %c6 = arith.constant 6 : index
    %c0_17 = arith.constant 0 : index
    %c0_18 = arith.constant 0 : index
    %33 = vector.load %arg2[%c0_16, %c6, %c0_17, %c0_18] : memref<1x8x16x16xf32, #tpu.memory_space<vmem>>, vector<1x2x16x16xf32>
    %34 = vector.shape_cast %33 : vector<1x2x16x16xf32> to vector<2x16x16xf32>
    %35 = vector.shape_cast %34 : vector<2x16x16xf32> to vector<32x16xf32>
    %cst_19 = arith.constant dense<0.000000e+00> : vector<32x32xf32>
    %36 = tpu.matmul %35, %15, %cst_19 {dimension_numbers = #tpu.dot_dimension_numbers<[1], [0], [0], [1], [0, 0, 1, 1], [], []>} : vector<32x16xf32>, vector<16x32xf32>, vector<32x32xf32> -> vector<32x32xf32>
    %37 = arith.addf %32, %36 : vector<32x32xf32>
    %38 = vector.shape_cast %37 : vector<32x32xf32> to vector<2x16x32xf32>
    %c0_20 = arith.constant 0 : index
    %c0_21 = arith.constant 0 : index
    %c0_22 = arith.constant 0 : index
    %c32 = arith.constant 32 : index
    %39 = vector.load %arg3[%c0_20, %c0_21, %c0_22, %c32] : memref<1x2x16x64xf32, #tpu.memory_space<vmem>>, vector<1x2x16x32xf32>
    %40 = vector.shape_cast %39 : vector<1x2x16x32xf32> to vector<2x16x32xf32>
    %41 = vector.shape_cast %38 : vector<2x16x32xf32> to vector<1x2x16x32xf32>
    tpu.vector_store %arg3[%c0_20, %c0_21, %c0_22, %c32], %41 {strides = array<i32>} : memref<1x2x16x64xf32, #tpu.memory_space<vmem>>, vector<1x2x16x32xf32>,
    return
  }
  func.func @transform_0(%arg0: i32, %arg1: i32) -> (i32, i32, i32, i32) {
    %c0_i32 = arith.constant 0 : i32
    %c0_i32_0 = arith.constant 0 : i32
    %c0_i32_1 = arith.constant 0 : i32
    return %arg0, %c0_i32, %arg1, %c0_i32_0 : i32, i32, i32, i32
  }
  func.func @transform_1(%arg0: i32, %arg1: i32) -> (i32, i32, i32, i32) {
    %c0_i32 = arith.constant 0 : i32
    %c0_i32_0 = arith.constant 0 : i32
    %c0_i32_1 = arith.constant 0 : i32
    return %arg0, %c0_i32, %arg1, %c0_i32_0 : i32, i32, i32, i32
  }
}

</mosaic_0001>

<llo_original>
// kernel: _depth_to_space_impl.1
$region0: #{_depth_to_space_impl.1}
  #allocation0 [shape = 'u32[]', space=smem, size = 0x4, offset = 0x4, fixed_abs, tag = 'smem constant byte address 0x4 - core index']
  #allocation1 [shape = 'u32[72,128]{1,0:T(1,128)}', space=vmem, size = 0x9000, scoped, tag = 'internal scratch']
  %s0 = inlined_call_operand.hbm [shape: f32[2,8,16,16], index: 0, kind: input, shape index: {}]
  %s1 = inlined_call_operand.vmem [shape: f32[2,2,16,64], index: 1, kind: output, shape index: {}]
  %s2 = sld [smem:[#allocation0]]
  $region41: #{_depth_to_space_impl.1} parent=0
    _
  %s4 = ssub.s32 1, %s2
  %s5 = scalar_select 0, %s4, %s2
  $region1: #{_depth_to_space_impl.1} parent=0
    #allocation2 [shape = 'u8[131072]{0}', space=vmem, size = 0x20000, scoped, tag = 'input window, operand 0']
    #allocation3 [shape = 's32[2]{0}', space=sflag, size = 0x8, scoped, tag = 'scoped memory for _depth_to_space_impl.1']
    %6 = vsyncpa [#allocation3], 0
    %s7 = scalar_lea.sflag [#allocation3], 1
    %8 = vsyncpa %s7, 0
    loop: start=0, step=1, limit=4
    $region2: #{_depth_to_space_impl.1} parent=1 // loop_pre_header
      _
    $region3: #{_depth_to_space_impl.1} parent=1 // loop_header
      %s10 = sphi 0, %s14
      %p11 = scmp.ge.s32.totalorder %s10, 4
      %s17 = sphi 0, %s29
      %s18 = sphi 0, %s25
      %s19 = sphi 0, %s17
      %s20 = sphi 0, %s18
      %s21 = sphi 0, %s19
      %s22 = sphi 0, %s20
      %s34 = sphi 0, %s36
      %s37 = sphi 0, %s34
      %s38 = sphi 0, %s37
      %s54 = sphi 0, %s38
      %s62 = sphi 0, %s64
      %s65 = sphi 0, %s62
      %s66 = sphi 0, %s65
      %s82 = sphi 0, %s66
    $region4: #{_depth_to_space_impl.1} parent=1 // loop_header_branch
      %13 = sbr.rel (%p11) target = $region8
    $region5: #{_depth_to_space_impl.1} parent=1 // loop_body
      %s15 = ssub.s32 %s10, 1
      %s16 = ssub.s32 %s10, 2
      %s23 = sadd.s32 1, %s18
      %p24 = scmp.ge.s32.totalorder %s23, 1
      %s25 = scalar_select %p24, 0, %s23
      %s26 = sadd.s32 1, %s17
      %s27 = scalar_select %p24, %s26, %s17
      %p28 = scmp.ge.s32.totalorder %s27, 2
      %s29 = scalar_select %p28, 0, %s27
      %s30 = ssub.s32 %s17, %s29
      %s31 = ssub.s32 %s18, %s25
      %s32 = sor.u32 %s30, %s31
      %p33 = scmp.eq.s32.totalorder %s32, 0
      %s35 = sadd.s32 %s34, 1
      %s36 = scalar_select %p33, %s34, %s35
      %p39 = pneg %p33
      %p40 = scmp.eq.s32.totalorder %s10, 1
      %p41 = por %p39, %p40
      %p42 = scmp.ne.s32.totalorder %s34, %s37
      %p43 = scmp.eq.s32.totalorder %s10, 0
      %p44 = por %p42, %p43
      %p45 = scmp.ne.s32.totalorder %s34, %s37
      %p46 = scmp.eq.s32.totalorder %s15, 1
      %p47 = por %p45, %p46
      %p48 = scmp.ne.s32.totalorder %s37, %s38
      %p49 = scmp.eq.s32.totalorder %s15, 0
      %p50 = por %p48, %p49
      %p51 = scmp.ne.s32.totalorder %s37, %s38
      %p52 = scmp.eq.s32.totalorder %s16, 1
      %p53 = por %p51, %p52
      %p55 = scmp.ne.s32.totalorder %s38, %s54
      %p56 = scmp.eq.s32.totalorder %s16, 0
      %p57 = por %p55, %p56
      %s58 = ssub.s32 %s17, %s29
      %s59 = ssub.s32 %s18, %s25
      %s60 = sor.u32 %s58, %s59
      %p61 = scmp.eq.s32.totalorder %s60, 0
      %s63 = sadd.s32 %s62, 1
      %s64 = scalar_select %p61, %s62, %s63
      %p67 = pneg %p61
      %p68 = scmp.eq.s32.totalorder %s10, 1
      %p69 = por %p67, %p68
      %p70 = scmp.ne.s32.totalorder %s62, %s65
      %p71 = scmp.eq.s32.totalorder %s10, 0
      %p72 = por %p70, %p71
      %p73 = scmp.ne.s32.totalorder %s62, %s65
      %p74 = scmp.eq.s32.totalorder %s15, 1
      %p75 = por %p73, %p74
      %p76 = scmp.ne.s32.totalorder %s65, %s66
      %p77 = scmp.eq.s32.totalorder %s15, 0
      %p78 = por %p76, %p77
      %p79 = scmp.ne.s32.totalorder %s65, %s66
      %p80 = scmp.eq.s32.totalorder %s16, 1
      %p81 = por %p79, %p80
      %p83 = scmp.ne.s32.totalorder %s66, %s82
      %p84 = scmp.eq.s32.totalorder %s16, 0
      %p85 = por %p83, %p84
      %p86 = scmp.le.s32.totalorder 1, %s10
      %p87 = scmp.lt.s32.totalorder %s10, 3
      %p88 = pnand %p86, %p87
      %p89 = pneg %p88
      // Predicated region
      $region9: #{_depth_to_space_impl.1} parent=5 // pred_check
        _
      $region10: #{_depth_to_space_impl.1} parent=5 // pred_check_branch
        %91 = sbr.rel (%p88) target = $region12
      $region11: #{_depth_to_space_impl.1} parent=5 // pred_region
        %s92 = ssub.s32 %s10, 1
      $region12: #{_depth_to_space_impl.1} parent=5 // pred_fallthru
        _
      %p93 = scmp.lt.s32.totalorder %s10, 2
      // Predicated region
      $region13: #{_depth_to_space_impl.1} parent=5 // pred_check
        %p94 = pneg %p93
      $region14: #{_depth_to_space_impl.1} parent=5 // pred_check_branch
        %96 = sbr.rel (%p94) target = $region16
      $region15: #{_depth_to_space_impl.1} parent=5 // pred_region
        // Predicated region
        $region17: #{_depth_to_space_impl.1} parent=15 // pred_check
          %p97 = pneg %p44
        $region18: #{_depth_to_space_impl.1} parent=15 // pred_check_branch
          %99 = sbr.rel (%p97) target = $region20
        $region19: #{_depth_to_space_impl.1} parent=15 // pred_region
          %s100 = sand.u32 %s34, 1
          %s101 = scalar_lea.sflag [#allocation3], %s100
          %s102 = sand.u32 %s34, 1
          %s103 = smul.addr %s102, 128
          %s104 = scalar_lea.vmem [#allocation2], %s103
          %s105 = smul.u32 2, %s18
          %107 = vsyncadd %s101, 0
          %s108 = smul.addr %s17, 16
          %s109 = sadd.s32 %s105, %s108
          %s110 = smul.addr %s109, 8
          %s111 = scalar_lea.hbm %s0, %s110
          %s112 = sshll.u32 %s111, 4
          %s113 = int_to_ptr.hbm [resolvable:$true] %s112
          %s114 = sshll.u32 %s104, 4
          %s115 = int_to_ptr.vmem [resolvable:$true] %s114
          %120 = dma.hbm_to_vmem [thread:$0]  %s113, 2048, %s115, %s101, 128, 128, 8
        $region20: #{_depth_to_space_impl.1} parent=15 // pred_fallthru
          _
      $region16: #{_depth_to_space_impl.1} parent=5 // pred_fallthru
        _
      %p121 = scmp.le.s32.totalorder 1, %s10
      %p122 = scmp.lt.s32.totalorder %s10, 3
      %p123 = pnand %p121, %p122
      %p124 = pneg %p123
      // Predicated region
      $region21: #{_depth_to_space_impl.1} parent=5 // pred_check
        _
      $region22: #{_depth_to_space_impl.1} parent=5 // pred_check_branch
        %126 = sbr.rel (%p123) target = $region24
      $region23: #{_depth_to_space_impl.1} parent=5 // pred_region
        %s127 = ssub.s32 %s10, 1
        %s128 = sand.u32 %s37, 1
        %s129 = scalar_lea.sflag [#allocation3], %s128
        %s130 = sand.u32 %s37, 1
        %s131 = smul.addr %s130, 128
        %s132 = scalar_lea.vmem [#allocation2], %s131
        // Predicated region
        $region25: #{_depth_to_space_impl.1} parent=23 // pred_check
          %p133 = pneg %p50
        $region26: #{_depth_to_space_impl.1} parent=23 // pred_check_branch
          %135 = sbr.rel (%p133) target = $region28
        $region27: #{_depth_to_space_impl.1} parent=23 // pred_region
          %137 = dma.done %s129, 2048
        $region28: #{_depth_to_space_impl.1} parent=23 // pred_fallthru
          _
        %s138 = sand.u32 %s37, 1
        %s139 = scalar_lea.sflag [#allocation3], %s138
        %s140 = sand.u32 %s37, 1
        %s141 = smul.addr %s140, 128
        %s142 = scalar_lea.vmem [#allocation2], %s141
        %p143 = pneg %p50
        %p144 = pneg %p47
        %p145 = pneg %p78
        %p146 = pneg %p75
        %s147 = smul.u32 2, %s20
        %p148 = scmp.lt.s32.totalorder %s19, 1
        %s149 = scalar_select %p148, %s19, 1
        %p150 = scmp.lt.s32.totalorder %s147, 1
        %s151 = scalar_select %p150, %s147, 1
        %s152 = smul.addr %s149, 4
        %s153 = sadd.s32 %s151, %s152
        %s154 = smul.addr %s153, 8
        %s155 = scalar_lea.vmem %s1, %s154
        %s156 = smul.u32 2, %s20
        %s157 = smul.u32 2, %s20
        %p158 = scmp.lt.s32.totalorder %s19, 1
        %s159 = scalar_select %p158, %s19, 1
        %p160 = scmp.lt.s32.totalorder %s157, 1
        %s161 = scalar_select %p160, %s157, 1
        %s162 = smul.addr %s159, 4
        %s163 = sadd.s32 %s161, %s162
        %s164 = smul.addr %s163, 8
        %s165 = scalar_lea.vmem %s1, %s164
        %s166 = smul.u32 2, %s20
        %v167 = vlaneseq
        %v168 = vshrl.u32 %v167, 7
        %v169 = vadd.s32 %v168, 8
        %v170 = vlaneseq
        %v171 = vand.u32 %v170, 127
        %v172 = vmul.u32 %v168, 2
        %v173 = vmul.u32 %v169, 2
        %vm174 = vcmp.eq.s32.totalorder %v171, %v172
        %vm175 = vcmp.eq.s32.totalorder %v171, %v173
        %v176 = vsel %vm174, 1, 0
        %v177 = vsel %vm175, 1, 0
        %v178 = vcvt.s32.f32 %v176
        %v179 = vcvt.s32.f32 %v177
        %v180 = vadd.s32 %v172, 1
        %v181 = vadd.s32 %v173, 1
        %vm182 = vcmp.eq.s32.totalorder %v171, %v180
        %vm183 = vcmp.eq.s32.totalorder %v171, %v181
        %v184 = vsel %vm182, 1, 0
        %v185 = vsel %vm183, 1, 0
        %v186 = vcvt.s32.f32 %v184
        %v187 = vcvt.s32.f32 %v185
        %v188 = vld [vmem:[%s132] sm:$0xff]
        %v189 = vld [vmem:[%s132 + $0x8] sm:$0xff]
        %v190 = vld [vmem:[%s132 + $0x10] sm:$0xff]
        %v191 = vld [vmem:[%s132 + $0x18] sm:$0xff]
        %s192 = scalar_lea.vmem %s132, 32 [#allocation2]
        %v193 = vld [vmem:[%s192] sm:$0xff]
        %v194 = vld [vmem:[%s192 + $0x8] sm:$0xff]
        %v195 = vld [vmem:[%s192 + $0x10] sm:$0xff]
        %v196 = vld [vmem:[%s192 + $0x18] sm:$0xff]
        %vm197 = vcmask 130048
        %v199 = vsel %vm197, %v193, 0
        %v202 = vsel %vm197, %v194, 0
        %v205 = vsel %vm197, %v195, 0
        %v208 = vsel %vm197, %v196, 0
        %210 = vmatpush.msra.mxu0 0.0
        %211 = vmatpush.msra.mxu0 0.0
        %212 = vmatpush.msra.mxu0 0.0
        %213 = vmatpush.msra.mxu0 0.0
        %214 = vmatpush.msra.mxu0 0.0
        %215 = vmatpush.msra.mxu0 0.0
        %216 = vmatpush.msra.mxu0 0.0
        %217 = vmatpush.msra.mxu0 0.0
        %218 = vmatpush.msra.mxu0 0.0
        %219 = vmatpush.msra.mxu0 0.0
        %220 = vmatpush.msra.mxu0 0.0
        %221 = vmatpush.msra.mxu0 0.0
        %222 = vmatpush.msra.mxu0 0.0
        %223 = vmatpush.msra.mxu0 0.0
        %224 = vmatpush.msra.mxu0 %v187
        %225 = vmatpush.msra.mxu0 %v186
        %226 = vmatmul.f32.gmra.mxu0 %v199
        %v227 = vpop.f32.mrf.mxu0
        %v228 = vadd.f32 0.0, %v227
        %229 = vmatmul.f32.gmra.mxu0 %v202
        %v230 = vpop.f32.mrf.mxu0
        %v231 = vadd.f32 0.0, %v230
        %232 = vmatmul.f32.gmra.mxu0 %v205
        %v233 = vpop.f32.mrf.mxu0
        %v234 = vadd.f32 0.0, %v233
        %235 = vmatmul.f32.gmra.mxu0 %v208
        %v236 = vpop.f32.mrf.mxu0
        %v237 = vadd.f32 0.0, %v236
        %238 = vdwg.mxu0
        %v240 = vsel %vm197, %v188, 0
        %v243 = vsel %vm197, %v189, 0
        %v246 = vsel %vm197, %v190, 0
        %v249 = vsel %vm197, %v191, 0
        %251 = vmatpush.msra.mxu0 0.0
        %252 = vmatpush.msra.mxu0 0.0
        %253 = vmatpush.msra.mxu0 0.0
        %254 = vmatpush.msra.mxu0 0.0
        %255 = vmatpush.msra.mxu0 0.0
        %256 = vmatpush.msra.mxu0 0.0
        %257 = vmatpush.msra.mxu0 0.0
        %258 = vmatpush.msra.mxu0 0.0
        %259 = vmatpush.msra.mxu0 0.0
        %260 = vmatpush.msra.mxu0 0.0
        %261 = vmatpush.msra.mxu0 0.0
        %262 = vmatpush.msra.mxu0 0.0
        %263 = vmatpush.msra.mxu0 0.0
        %264 = vmatpush.msra.mxu0 0.0
        %265 = vmatpush.msra.mxu0 %v179
        %266 = vmatpush.msra.mxu0 %v178
        %267 = vmatmul.f32.gmra.mxu0 %v240
        %v268 = vpop.f32.mrf.mxu0
        %v269 = vadd.f32 %v228, %v268
        %270 = vmatmul.f32.gmra.mxu0 %v243
        %v271 = vpop.f32.mrf.mxu0
        %v272 = vadd.f32 %v231, %v271
        %273 = vmatmul.f32.gmra.mxu0 %v246
        %v274 = vpop.f32.mrf.mxu0
        %v275 = vadd.f32 %v234, %v274
        %276 = vmatmul.f32.gmra.mxu0 %v249
        %v277 = vpop.f32.mrf.mxu0
        %v278 = vadd.f32 %v237, %v277
        %279 = vdwg.mxu0
        %vm280 = vcmask 261120
        %281 = vst.msk [vmem:[%s165] sm:$0xff] %vm280, %v269
        %282 = vst.msk [vmem:[%s165 + $0x8] sm:$0xff] %vm280, %v272
        %283 = vst.msk [vmem:[%s165 + $0x10] sm:$0xff] %vm280, %v275
        %284 = vst.msk [vmem:[%s165 + $0x18] sm:$0xff] %vm280, %v278
        %s285 = scalar_lea.vmem %s132, 64 [#allocation2]
        %v286 = vld [vmem:[%s285] sm:$0xff]
        %v287 = vld [vmem:[%s285 + $0x8] sm:$0xff]
        %v288 = vld [vmem:[%s285 + $0x10] sm:$0xff]
        %v289 = vld [vmem:[%s285 + $0x18] sm:$0xff]
        %s290 = scalar_lea.vmem %s132, 96 [#allocation2]
        %v291 = vld [vmem:[%s290] sm:$0xff]
        %v292 = vld [vmem:[%s290 + $0x8] sm:$0xff]
        %v293 = vld [vmem:[%s290 + $0x10] sm:$0xff]
        %v294 = vld [vmem:[%s290 + $0x18] sm:$0xff]
        %v296 = vsel %vm197, %v291, 0
        %v299 = vsel %vm197, %v292, 0
        %v302 = vsel %vm197, %v293, 0
        %v305 = vsel %vm197, %v294, 0
        %307 = vmatpush.msra.mxu0 0.0
        %308 = vmatpush.msra.mxu0 0.0
        %309 = vmatpush.msra.mxu0 0.0
        %310 = vmatpush.msra.mxu0 0.0
        %311 = vmatpush.msra.mxu0 0.0
        %312 = vmatpush.msra.mxu0 0.0
        %313 = vmatpush.msra.mxu0 0.0
        %314 = vmatpush.msra.mxu0 0.0
        %315 = vmatpush.msra.mxu0 0.0
        %316 = vmatpush.msra.mxu0 0.0
        %317 = vmatpush.msra.mxu0 0.0
        %318 = vmatpush.msra.mxu0 0.0
        %319 = vmatpush.msra.mxu0 0.0
        %320 = vmatpush.msra.mxu0 0.0
        %321 = vmatpush.msra.mxu0 %v187
        %322 = vmatpush.msra.mxu0 %v186
        %323 = vmatmul.f32.gmra.mxu0 %v296
        %v324 = vpop.f32.mrf.mxu0
        %v325 = vadd.f32 0.0, %v324
        %326 = vmatmul.f32.gmra.mxu0 %v299
        %v327 = vpop.f32.mrf.mxu0
        %v328 = vadd.f32 0.0, %v327
        %329 = vmatmul.f32.gmra.mxu0 %v302
        %v330 = vpop.f32.mrf.mxu0
        %v331 = vadd.f32 0.0, %v330
        %332 = vmatmul.f32.gmra.mxu0 %v305
        %v333 = vpop.f32.mrf.mxu0
        %v334 = vadd.f32 0.0, %v333
        %335 = vdwg.mxu0
        %v337 = vsel %vm197, %v286, 0
        %v340 = vsel %vm197, %v287, 0
        %v343 = vsel %vm197, %v288, 0
        %v346 = vsel %vm197, %v289, 0
        %348 = vmatpush.msra.mxu0 0.0
        %349 = vmatpush.msra.mxu0 0.0
        %350 = vmatpush.msra.mxu0 0.0
        %351 = vmatpush.msra.mxu0 0.0
        %352 = vmatpush.msra.mxu0 0.0
        %353 = vmatpush.msra.mxu0 0.0
        %354 = vmatpush.msra.mxu0 0.0
        %355 = vmatpush.msra.mxu0 0.0
        %356 = vmatpush.msra.mxu0 0.0
        %357 = vmatpush.msra.mxu0 0.0
        %358 = vmatpush.msra.mxu0 0.0
        %359 = vmatpush.msra.mxu0 0.0
        %360 = vmatpush.msra.mxu0 0.0
        %361 = vmatpush.msra.mxu0 0.0
        %362 = vmatpush.msra.mxu0 %v179
        %363 = vmatpush.msra.mxu0 %v178
        %364 = vmatmul.f32.gmra.mxu0 %v337
        %v365 = vpop.f32.mrf.mxu0
        %v366 = vadd.f32 %v325, %v365
        %367 = vmatmul.f32.gmra.mxu0 %v340
        %v368 = vpop.f32.mrf.mxu0
        %v369 = vadd.f32 %v328, %v368
        %370 = vmatmul.f32.gmra.mxu0 %v343
        %v371 = vpop.f32.mrf.mxu0
        %v372 = vadd.f32 %v331, %v371
        %373 = vmatmul.f32.gmra.mxu0 %v346
        %v374 = vpop.f32.mrf.mxu0
        %v375 = vadd.f32 %v334, %v374
        %376 = vdwg.mxu0
        %381 = vrot.lane.b32.xlu0 %v366, 32
        %v382 = vpop.permute.xlu0 %381
        %383 = vrot.lane.b32.xlu0 %v369, 32
        %v384 = vpop.permute.xlu0 %383
        %385 = vrot.lane.b32.xlu0 %v372, 32
        %v386 = vpop.permute.xlu0 %385
        %387 = vrot.lane.b32.xlu0 %v375, 32
        %v388 = vpop.permute.xlu0 %387
        %vm393 = vcmask 523520
        %394 = vst.msk [vmem:[%s165] sm:$0xff] %vm393, %v382
        %395 = vst.msk [vmem:[%s165 + $0x8] sm:$0xff] %vm393, %v384
        %396 = vst.msk [vmem:[%s165 + $0x10] sm:$0xff] %vm393, %v386
        %397 = vst.msk [vmem:[%s165 + $0x18] sm:$0xff] %vm393, %v388
        %s398 = smul.u32 2, %s20
        %p399 = scmp.lt.s32.totalorder %s19, 1
        %s400 = scalar_select %p399, %s19, 1
        %p401 = scmp.lt.s32.totalorder %s398, 1
        %s402 = scalar_select %p401, %s398, 1
        %s403 = smul.addr %s400, 4
        %s404 = sadd.s32 %s402, %s403
        %s405 = smul.addr %s404, 8
        %s406 = scalar_lea.vmem %s1, %s405
        // Predicated region
        $region29: #{_depth_to_space_impl.1} parent=23 // pred_check
          %p407 = pneg %p75
        $region30: #{_depth_to_space_impl.1} parent=23 // pred_check_branch
          %409 = sbr.rel (%p407) target = $region32
        $region31: #{_depth_to_space_impl.1} parent=23 // pred_region
          %s410 = smul.u32 2, %s20
        $region32: #{_depth_to_space_impl.1} parent=23 // pred_fallthru
          _
      $region24: #{_depth_to_space_impl.1} parent=5 // pred_fallthru
        _
      %p411 = scmp.le.s32.totalorder 2, %s10
      // Predicated region
      $region33: #{_depth_to_space_impl.1} parent=5 // pred_check
        %p412 = pneg %p411
      $region34: #{_depth_to_space_impl.1} parent=5 // pred_check_branch
        %414 = sbr.rel (%p412) target = $region36
      $region35: #{_depth_to_space_impl.1} parent=5 // pred_region
        %s415 = ssub.s32 %s10, 2
        // Predicated region
        $region37: #{_depth_to_space_impl.1} parent=35 // pred_check
          %p416 = pneg %p81
        $region38: #{_depth_to_space_impl.1} parent=35 // pred_check_branch
          %418 = sbr.rel (%p416) target = $region40
        $region39: #{_depth_to_space_impl.1} parent=35 // pred_region
          %s419 = smul.u32 2, %s22
          %p420 = scmp.lt.s32.totalorder %s21, 1
          %s421 = scalar_select %p420, %s21, 1
          %p422 = scmp.lt.s32.totalorder %s419, 1
          %s423 = scalar_select %p422, %s419, 1
          %s424 = smul.addr %s421, 4
          %s425 = sadd.s32 %s423, %s424
          %s426 = smul.addr %s425, 8
          %s427 = scalar_lea.vmem %s1, %s426
        $region40: #{_depth_to_space_impl.1} parent=35 // pred_fallthru
          _
      $region36: #{_depth_to_space_impl.1} parent=5 // pred_fallthru
        _
    $region6: #{_depth_to_space_impl.1} parent=1 // loop_footer
      %s14 = sadd.s32 1, %s10
    $region7: #{_depth_to_space_impl.1} parent=1 // loop_footer_branch
      %9 = sbr.rel target = $region3
    $region8: #{_depth_to_space_impl.1} parent=1 // loop_exit
      _
    %428 = vsyncpa [#allocation3], 1
    %s429 = scalar_lea.sflag [#allocation3], 1
    %430 = vsyncpa %s429, 1

</llo_original>
